<compile_context>
chip_gen: v7x
topology: tpu7x:2x2x1
jax: 0.10.0
libtpu: 0.0.40
codegen_flags: <defaults>
</compile_context>

<pallas_src>
import functools

import jax
import jax.numpy as jnp
from jax import lax
from jax.experimental import pallas as pl
from jax.experimental.pallas import tpu as pltpu


_SUB_ROWS = 256  # rows per in-kernel sub-chunk (bounds live f32 temporaries)


def make_inv_freq(demb: int) -> jnp.ndarray:
    # Same deterministic "parameter" as the PyTorch __init__ buffer.
    return 1.0 / (10000.0 ** (jnp.arange(0.0, demb, 2.0, dtype=jnp.float32) / demb))


def _round_up(x: int, m: int) -> int:
    return ((x + m - 1) // m) * m


def _vmem_capacity_bytes() -> int:
    """Generation-aware physical VMEM size (falls back to v7x's 64 MiB)."""
    try:
        cap = getattr(pltpu.get_tpu_info(), "vmem_capacity_bytes", None)
        if cap:
            return int(cap)
    except Exception:
        pass
    return 64 * 1024 * 1024


def _sinusoid_kernel(pos_ref, freq_ref, out_ref, *, half: int, sin_first: bool,
                     sub_rows: int, n_sub: int):
    # pos_ref : (TL, 1) f32, freq_ref : (1, H) f32, out_ref : (TL, 2*H)
    freq = freq_ref[...]                                  # hoisted (1, H) load

    def do_chunk(r0):
        rows = pl.ds(r0, sub_rows)
        x = pos_ref[rows, :] * freq                       # (sub, H) outer product (VPU)
        s = jnp.sin(x)                                    # EUP
        if sin_first:
            out_ref[rows, :half] = s.astype(out_ref.dtype)
        else:
            out_ref[rows, half:] = s.astype(out_ref.dtype)
        c = jnp.cos(x)                                    # EUP (sin already stored)
        if sin_first:
            out_ref[rows, half:] = c.astype(out_ref.dtype)
        else:
            out_ref[rows, :half] = c.astype(out_ref.dtype)

    if n_sub == 1:
        do_chunk(0)
    else:
        def body(i, carry):
            do_chunk(pl.multiple_of(i * sub_rows, sub_rows))
            return carry
        lax.fori_loop(0, n_sub, body, 0)


def _pick_row_tile(L: int, H: int, out_itemsize: int) -> int:
    demb = 2 * H
    vmem_cap = _vmem_capacity_bytes()
    # Byte budget for this kernel's working set (well under scoped VMEM on
    # every generation: v5e/v6e 128 MiB physical, v7x 64 MiB physical).
    budget = min(vmem_cap // 3, 24 * 1024 * 1024)
    # f32 sub-chunk temporaries (x / sin / cos) + tiny freq tile.
    fixed = 3 * _SUB_ROWS * H * 4 + 2 * 8 * max(H, 128) * 4
    # Per-row bytes: double-buffered output row + double-buffered pos row
    # (the (TL, 1) pos block is lane-padded to 128 in VMEM).
    per_row = 2 * demb * out_itemsize + 2 * 128 * 4
    tl = max(8, (budget - fixed) // per_row)
    # Keep >= 4 grid steps (when L allows): shards across v7x's 2 TensorCores
    # and overlaps sin/cos compute with output-writeback DMA.
    tl = min(tl, _round_up(pl.cdiv(L, 4), 8))
    # Align to the in-kernel sub-chunk (or at least the 8-row sublane tile).
    if tl >= _SUB_ROWS:
        tl = (tl // _SUB_ROWS) * _SUB_ROWS
    else:
        tl = max(8, (tl // 8) * 8)
    return tl


def _pallas_pos_emb(pos_seq_f32, inv_freq_f32, sin_first: bool, out_dtype):
    L = pos_seq_f32.shape[0]
    H = inv_freq_f32.shape[0]
    demb = 2 * H
    out_itemsize = jnp.dtype(out_dtype).itemsize

    tl = _pick_row_tile(L, H, out_itemsize)
    grid = (pl.cdiv(L, tl),)
    sub_rows = _SUB_ROWS if (tl >= _SUB_ROWS and tl % _SUB_ROWS == 0) else tl
    n_sub = tl // sub_rows

    pos2d = pos_seq_f32.reshape(L, 1)          # sublane axis = L
    freq2d = inv_freq_f32.reshape(1, H)        # lane axis    = H

    kernel = functools.partial(_sinusoid_kernel, half=H, sin_first=sin_first,
                               sub_rows=sub_rows, n_sub=n_sub)

    cost = pl.CostEstimate(
        flops=L * H,                           # the outer-product multiplies
        transcendentals=L * demb,              # one sin + one cos per (row, freq)
        bytes_accessed=4 * (L + H) + out_itemsize * L * demb,
    )

    # Explicit limit so big tiles compile on v5e's 16 MiB scoped default and
    # stay within v7x's 64 MiB physical VMEM.
    vmem_limit = int(min(_vmem_capacity_bytes() // 2, 80 * 1024 * 1024))

    return pl.pallas_call(
        kernel,
        out_shape=jax.ShapeDtypeStruct((L, demb), out_dtype),
        grid=grid,
        in_specs=[
            pl.BlockSpec((tl, 1), lambda i: (i, 0)),
            pl.BlockSpec((1, H), lambda i: (0, 0)),
        ],
        out_specs=pl.BlockSpec((tl, demb), lambda i: (i, 0)),
        compiler_params=pltpu.CompilerParams(
            dimension_semantics=("parallel",),  # shard L across TCs on v7x
            vmem_limit_bytes=vmem_limit,
        ),
        cost_estimate=cost,
    )(pos2d, freq2d)


def sinusoidal_positional_embedding(pos_seq, inv_freq, sin_first=True, bsz=None,
                                    out_dtype=None, use_pallas=None):
    """JAX/Pallas equivalent of SinusoidalPositionalEmbedding.forward.

    out_dtype defaults to pos_seq's floating dtype (PyTorch float-buffer
    semantics); pass jnp.bfloat16 to halve the HBM writeback of this
    writeback-bound op (math stays in f32 inside the kernel).
    """
    if out_dtype is None:
        out_dtype = (pos_seq.dtype if jnp.issubdtype(pos_seq.dtype, jnp.floating)
                     else jnp.float32)
    pos_seq = pos_seq.astype(jnp.float32)
    inv_freq = inv_freq.astype(jnp.float32)
    L = pos_seq.shape[0]
    H = inv_freq.shape[0]
    demb = 2 * H

    if use_pallas is None:
        # Pallas only pays off with lane-aligned halves and >= ~1 MiB of output;
        # below that, launch + single-step overhead loses to the XLA-fused path.
        out_bytes = L * demb * jnp.dtype(out_dtype).itemsize
        use_pallas = (H % 128 == 0) and (out_bytes >= (1 << 20))

    if use_pallas:
        pos_emb = _pallas_pos_emb(pos_seq, inv_freq, sin_first, out_dtype)
    else:
        x = jnp.outer(pos_seq, inv_freq)
        s, c = jnp.sin(x), jnp.cos(x)
        halves = (s, c) if sin_first else (c, s)
        pos_emb = jnp.concatenate(halves, axis=-1).astype(out_dtype)

    pos_emb = pos_emb[:, None, :]              # (L, 1, demb), matches torch [:, None, :]
    if bsz is not None:
        # broadcast, don't materialize the repeat (consumer can fuse it)
        pos_emb = jnp.broadcast_to(pos_emb, (L, bsz, demb))
    return pos_emb


def _reference(pos_seq, inv_freq, sin_first=True, bsz=None):
    pos_seq = pos_seq.astype(jnp.float32)
    sinusoid_inp = jnp.outer(pos_seq, inv_freq.astype(pos_seq.dtype))
    if sin_first:
        pos_emb = jnp.concatenate([jnp.sin(sinusoid_inp), jnp.cos(sinusoid_inp)], axis=-1)
    else:
        pos_emb = jnp.concatenate([jnp.cos(sinusoid_inp), jnp.sin(sinusoid_inp)], axis=-1)
    pos_emb = pos_emb[:, None, :]
    if bsz is not None:
        pos_emb = jnp.tile(pos_emb, (1, bsz, 1))
    return pos_emb


if __name__ == "__main__":
    key = jax.random.PRNGKey(0)
    k1, k2, k3 = jax.random.split(key, 3)

    demb = 256                       # H = 128 -> both halves lane-aligned
    inv_freq = make_inv_freq(demb)

    # --- Small forced-Pallas case (multi-step grid, single sub-chunk) -------
    L = 128
    bsz = 2
    pos_seq = jax.random.randint(k1, (L,), -L, L).astype(jnp.float32)
    out = sinusoidal_positional_embedding(pos_seq, inv_freq, sin_first=True,
                                          bsz=bsz, use_pallas=True)
    out = jax.block_until_ready(out)
    ref = _reference(pos_seq, inv_freq, sin_first=True, bsz=bsz)
    assert out.shape == (L, bsz, demb), out.shape
    assert jnp.allclose(out, ref, atol=1e-5, rtol=1e-5), "mismatch (pallas, sin_first=True)"

    # sin_first=False, no bsz
    out_b = sinusoidal_positional_embedding(pos_seq, inv_freq, sin_first=False,
                                            bsz=None, use_pallas=True)
    out_b = jax.block_until_ready(out_b)
    ref_b = _reference(pos_seq, inv_freq, sin_first=False, bsz=None)
    assert out_b.shape == (L, 1, demb), out_b.shape
    assert jnp.allclose(out_b, ref_b, atol=1e-5, rtol=1e-5), "mismatch (pallas, sin_first=False)"

    # --- Auto-dispatch (>=1 MiB output) -> Pallas path, exercises the
    # --- in-kernel sub-chunk loop (tl=512, sub=256) and 4-step grid ----------
    L2 = 2048
    pos2 = jax.random.randint(k2, (L2,), -L2, L2).astype(jnp.float32)
    out2 = sinusoidal_positional_embedding(pos2, inv_freq, sin_first=True, bsz=None)
    out2 = jax.block_until_ready(out2)
    ref2 = _reference(pos2, inv_freq, sin_first=True, bsz=None)
    assert out2.shape == (L2, 1, demb), out2.shape
    assert jnp.allclose(out2, ref2, atol=1e-5, rtol=1e-5), "mismatch (pallas, sub-chunk loop)"

    # --- Ragged tail block (L % tl != 0) -------------------------------------
    L3 = 300
    pos3 = jax.random.randint(k3, (L3,), -L3, L3).astype(jnp.float32)
    out3 = sinusoidal_positional_embedding(pos3, inv_freq, sin_first=True,
                                           bsz=None, use_pallas=True)
    out3 = jax.block_until_ready(out3)
    ref3 = _reference(pos3, inv_freq, sin_first=True, bsz=None)
    assert out3.shape == (L3, 1, demb), out3.shape
    assert jnp.allclose(out3, ref3, atol=1e-5, rtol=1e-5), "mismatch (pallas, ragged tail)"

    # --- bf16 output (halves writeback bytes; math stays f32 in-kernel) ------
    out_bf = sinusoidal_positional_embedding(pos_seq, inv_freq, sin_first=True,
                                             bsz=None, out_dtype=jnp.bfloat16,
                                             use_pallas=True)
    out_bf = jax.block_until_ready(out_bf)
    assert out_bf.dtype == jnp.bfloat16
    ref_bf = _reference(pos_seq, inv_freq, sin_first=True, bsz=None)
    assert jnp.allclose(out_bf.astype(jnp.float32), ref_bf, atol=2e-2), "mismatch (bf16)"

    # --- Tiny / lane-sparse sizes: auto-dispatch uses fused pure-JAX path ----
    demb_s, L_s = 32, 8
    pos_s = jax.random.randint(k2, (L_s,), -L_s, L_s).astype(jnp.float32)
    inv_s = make_inv_freq(demb_s)
    out_s = sinusoidal_positional_embedding(pos_s, inv_s, sin_first=True, bsz=2)
    out_s = jax.block_until_ready(out_s)
    ref_s = _reference(pos_s, inv_s, sin_first=True, bsz=2)
    assert out_s.shape == (L_s, 2, demb_s), out_s.shape
    assert jnp.allclose(out_s, ref_s, atol=1e-6), "mismatch (fallback path)"

    print("KERNEL_OK")
</pallas_src>

<mosaic_0001>
module attributes {stable_mosaic.version = 11 : i64} {
  func.func @_sinusoid_kernel(%arg0: i32, %arg1: memref<32x1xf32, #tpu.memory_space<vmem>>, %arg2: memref<1x128xf32, #tpu.memory_space<vmem>>, %arg3: memref<32x256xf32, #tpu.memory_space<vmem>>) attributes {dimension_semantics = [#tpu.dimension_semantics<parallel>], iteration_bounds = array<i64: 4>, scalar_prefetch = 0 : i64, scratch_operands = 0 : i64, tpu.core_type = #tpu.core_type<tc>, window_params = [{transform_indices = @transform_0, window_bounds = array<i64: 32, 1>}, {pipeline_mode = #tpu.pipeline_mode<synchronous>, transform_indices = @transform_1, window_bounds = array<i64: 1, 128>}, {transform_indices = @transform_2, window_bounds = array<i64: 32, 256>}]} {
    %c0 = arith.constant 0 : index
    %c0_0 = arith.constant 0 : index
    %0 = vector.load %arg2[%c0, %c0_0] : memref<1x128xf32, #tpu.memory_space<vmem>>, vector<1x128xf32>
    %c0_1 = arith.constant 0 : index
    %c0_2 = arith.constant 0 : index
    %1 = vector.load %arg1[%c0_1, %c0_2] : memref<32x1xf32, #tpu.memory_space<vmem>>, vector<32x1xf32>
    %2 = vector.broadcast %1 : vector<32x1xf32> to vector<32x128xf32>
    %3 = vector.broadcast %0 : vector<1x128xf32> to vector<32x128xf32>
    %4 = arith.mulf %2, %3 : vector<32x128xf32>
    %5 = math.sin %4 : vector<32x128xf32>
    %c0_3 = arith.constant 0 : index
    %c0_4 = arith.constant 0 : index
    %6 = vector.load %arg3[%c0_3, %c0_4] : memref<32x256xf32, #tpu.memory_space<vmem>>, vector<32x128xf32>
    tpu.vector_store %arg3[%c0_3, %c0_4], %5 {strides = array<i32>} : memref<32x256xf32, #tpu.memory_space<vmem>>, vector<32x128xf32>,
    %7 = math.cos %4 : vector<32x128xf32>
    %c0_5 = arith.constant 0 : index
    %c128 = arith.constant 128 : index
    %8 = vector.load %arg3[%c0_5, %c128] : memref<32x256xf32, #tpu.memory_space<vmem>>, vector<32x128xf32>
    tpu.vector_store %arg3[%c0_5, %c128], %7 {strides = array<i32>} : memref<32x256xf32, #tpu.memory_space<vmem>>, vector<32x128xf32>,
    return
  }
  func.func @transform_0(%arg0: i32) -> (i32, i32) {
    %c0_i32 = arith.constant 0 : i32
    %c0_i32_0 = arith.constant 0 : i32
    return %arg0, %c0_i32 : i32, i32
  }
  func.func @transform_1(%arg0: i32) -> (i32, i32) {
    %c0_i32 = arith.constant 0 : i32
    %c0_i32_0 = arith.constant 0 : i32
    %c0_i32_1 = arith.constant 0 : i32
    return %c0_i32, %c0_i32_0 : i32, i32
  }
  func.func @transform_2(%arg0: i32) -> (i32, i32) {
    %c0_i32 = arith.constant 0 : i32
    %c0_i32_0 = arith.constant 0 : i32
    return %arg0, %c0_i32 : i32, i32
  }
}

</mosaic_0001>

<llo_original>
// kernel: tpu_custom_call.1
$region0: #{tpu_custom_call.1}
  #allocation0 [shape = 'u32[]', space=smem, size = 0x4, offset = 0x4, fixed_abs, tag = 'smem constant byte address 0x4 - core index']
  #allocation1 [shape = 'u32[144,128]{1,0:T(1,128)}', space=vmem, size = 0x12000, scoped, tag = 'internal scratch']
  %s0 = inlined_call_operand.vmem [shape: f32[128,1], index: 0, kind: input, shape index: {}]
  %s1 = inlined_call_operand.vmem [shape: f32[1,128], index: 1, kind: input, shape index: {}]
  %s2 = inlined_call_operand.hbm [shape: f32[128,256], index: 2, kind: output, shape index: {}]
  %s3 = sld [smem:[#allocation0]]
  $region41: #{tpu_custom_call.1} parent=0
    _
  %s5 = ssub.s32 1, %s3
  %s6 = scalar_select 0, %s5, %s3
  $region1: #{tpu_custom_call.1} parent=0
    #allocation2 [shape = 'u8[65536]{0}', space=vmem, size = 0x10000, scoped, tag = 'output window, operand 0']
    #allocation3 [shape = 's32[2]{0}', space=sflag, size = 0x8, scoped, tag = 'scoped memory for tpu_custom_call.1']
    %7 = vsyncpa [#allocation3], 0
    %s8 = scalar_lea.sflag [#allocation3], 1
    %9 = vsyncpa %s8, 0
    loop: start=0, step=1, limit=6
    $region2: #{tpu_custom_call.1} parent=1 // loop_pre_header
      _
    $region3: #{tpu_custom_call.1} parent=1 // loop_header
      %s11 = sphi 0, %s15
      %p12 = scmp.ge.s32.totalorder %s11, 6
      %s21 = sphi 0, %s23
      %s24 = sphi 0, %s21
      %s25 = sphi 0, %s24
      %s41 = sphi 0, %s25
      %s45 = sphi 0, %s45
      %s47 = sphi 0, %s45
      %s48 = sphi 0, %s47
      %s62 = sphi 0, %s48
      %s68 = sphi 0, %s70
      %s71 = sphi 0, %s68
      %s72 = sphi 0, %s71
      %s88 = sphi 0, %s72
    $region4: #{tpu_custom_call.1} parent=1 // loop_header_branch
      %14 = sbr.rel (%p12) target = $region8
    $region5: #{tpu_custom_call.1} parent=1 // loop_body
      %s16 = ssub.s32 %s11, 1
      %s17 = ssub.s32 %s11, 2
      %s18 = sadd.s32 %s11, 1
      %s19 = ssub.s32 %s11, %s18
      %p20 = scmp.eq.s32.totalorder %s19, 0
      %s22 = sadd.s32 %s21, 1
      %s23 = scalar_select %p20, %s21, %s22
      %p26 = pneg %p20
      %p27 = scmp.eq.s32.totalorder %s11, 3
      %p28 = por %p26, %p27
      %p29 = scmp.ne.s32.totalorder %s21, %s24
      %p30 = scmp.eq.s32.totalorder %s11, 0
      %p31 = por %p29, %p30
      %p32 = scmp.ne.s32.totalorder %s21, %s24
      %p33 = scmp.eq.s32.totalorder %s16, 3
      %p34 = por %p32, %p33
      %p35 = scmp.ne.s32.totalorder %s24, %s25
      %p36 = scmp.eq.s32.totalorder %s16, 0
      %p37 = por %p35, %p36
      %p38 = scmp.ne.s32.totalorder %s24, %s25
      %p39 = scmp.eq.s32.totalorder %s17, 3
      %p40 = por %p38, %p39
      %p42 = scmp.ne.s32.totalorder %s25, %s41
      %p43 = scmp.eq.s32.totalorder %s17, 0
      %p44 = por %p42, %p43
      %s46 = sadd.s32 %s45, 1
      %p49 = scmp.eq.s32.totalorder %s11, 3
      %p50 = scmp.ne.s32.totalorder %s45, %s47
      %p51 = scmp.eq.s32.totalorder %s11, 0
      %p52 = por %p50, %p51
      %p53 = scmp.ne.s32.totalorder %s45, %s47
      %p54 = scmp.eq.s32.totalorder %s16, 3
      %p55 = por %p53, %p54
      %p56 = scmp.ne.s32.totalorder %s47, %s48
      %p57 = scmp.eq.s32.totalorder %s16, 0
      %p58 = por %p56, %p57
      %p59 = scmp.ne.s32.totalorder %s47, %s48
      %p60 = scmp.eq.s32.totalorder %s17, 3
      %p61 = por %p59, %p60
      %p63 = scmp.ne.s32.totalorder %s48, %s62
      %p64 = scmp.eq.s32.totalorder %s17, 0
      %p65 = por %p63, %p64
      %s66 = ssub.s32 %s11, %s18
      %p67 = scmp.eq.s32.totalorder %s66, 0
      %s69 = sadd.s32 %s68, 1
      %s70 = scalar_select %p67, %s68, %s69
      %p73 = pneg %p67
      %p74 = scmp.eq.s32.totalorder %s11, 3
      %p75 = por %p73, %p74
      %p76 = scmp.ne.s32.totalorder %s68, %s71
      %p77 = scmp.eq.s32.totalorder %s11, 0
      %p78 = por %p76, %p77
      %p79 = scmp.ne.s32.totalorder %s68, %s71
      %p80 = scmp.eq.s32.totalorder %s16, 3
      %p81 = por %p79, %p80
      %p82 = scmp.ne.s32.totalorder %s71, %s72
      %p83 = scmp.eq.s32.totalorder %s16, 0
      %p84 = por %p82, %p83
      %p85 = scmp.ne.s32.totalorder %s71, %s72
      %p86 = scmp.eq.s32.totalorder %s17, 3
      %p87 = por %p85, %p86
      %p89 = scmp.ne.s32.totalorder %s72, %s88
      %p90 = scmp.eq.s32.totalorder %s17, 0
      %p91 = por %p89, %p90
      %p92 = scmp.le.s32.totalorder 1, %s11
      %p93 = scmp.lt.s32.totalorder %s11, 5
      %p94 = pnand %p92, %p93
      %p95 = pneg %p94
      // Predicated region
      $region9: #{tpu_custom_call.1} parent=5 // pred_check
        _
      $region10: #{tpu_custom_call.1} parent=5 // pred_check_branch
        %97 = sbr.rel (%p94) target = $region12
      $region11: #{tpu_custom_call.1} parent=5 // pred_region
        %s98 = ssub.s32 %s11, 1
        // Predicated region
        $region13: #{tpu_custom_call.1} parent=11 // pred_check
          %p99 = pneg %p58
        $region14: #{tpu_custom_call.1} parent=11 // pred_check_branch
          %101 = sbr.rel (%p99) target = $region16
        $region15: #{tpu_custom_call.1} parent=11 // pred_region
          _
        $region16: #{tpu_custom_call.1} parent=11 // pred_fallthru
          _
      $region12: #{tpu_custom_call.1} parent=5 // pred_fallthru
        _
      %p102 = scmp.lt.s32.totalorder %s11, 4
      // Predicated region
      $region17: #{tpu_custom_call.1} parent=5 // pred_check
        %p103 = pneg %p102
      $region18: #{tpu_custom_call.1} parent=5 // pred_check_branch
        %105 = sbr.rel (%p103) target = $region20
      $region19: #{tpu_custom_call.1} parent=5 // pred_region
        // Predicated region
        $region21: #{tpu_custom_call.1} parent=19 // pred_check
          %p106 = pneg %p31
        $region22: #{tpu_custom_call.1} parent=19 // pred_check_branch
          %108 = sbr.rel (%p106) target = $region24
        $region23: #{tpu_custom_call.1} parent=19 // pred_region
          %s109 = smul.u32 4, %s11
          %p110 = scmp.lt.s32.totalorder %s109, 15
          %s111 = scalar_select %p110, %s109, 15
          %s112 = smul.addr %s111, 8
          %s113 = scalar_lea.vmem %s0, %s112
          %s114 = smul.u32 4, %s11
        $region24: #{tpu_custom_call.1} parent=19 // pred_fallthru
          _
      $region20: #{tpu_custom_call.1} parent=5 // pred_fallthru
        _
      %p115 = scmp.le.s32.totalorder 1, %s11
      %p116 = scmp.lt.s32.totalorder %s11, 5
      %p117 = pnand %p115, %p116
      %p118 = pneg %p117
      // Predicated region
      $region25: #{tpu_custom_call.1} parent=5 // pred_check
        _
      $region26: #{tpu_custom_call.1} parent=5 // pred_check_branch
        %120 = sbr.rel (%p117) target = $region28
      $region27: #{tpu_custom_call.1} parent=5 // pred_region
        %s121 = ssub.s32 %s11, 1
        %s122 = smul.u32 4, %s16
        %p123 = scmp.lt.s32.totalorder %s122, 15
        %s124 = scalar_select %p123, %s122, 15
        %s125 = smul.addr %s124, 8
        %s126 = scalar_lea.vmem %s0, %s125
        %p127 = pneg %p37
        %p128 = pneg %p34
        %p129 = pneg %p58
        %p130 = pneg %p55
        %p131 = pneg %p84
        %p132 = pneg %p81
        %s133 = sand.u32 %s71, 1
        %s134 = scalar_lea.sflag [#allocation3], %s133
        %s135 = sand.u32 %s71, 1
        %s136 = smul.addr %s135, 64
        %s137 = scalar_lea.vmem [#allocation2], %s136
        %s138 = smul.u32 4, %s16
        %p139 = scmp.lt.s32.totalorder %s138, 15
        %s140 = scalar_select %p139, %s138, 15
        %s141 = smul.addr %s140, 8
        %s142 = scalar_lea.vmem %s0, %s141
        %s143 = smul.u32 4, %s16
        %s144 = smul.u32 4, %s16
        %v145 = vld [vmem:[%s1] sm:$0x1]
        %v146 = vld [vmem:[%s142] sm:$0xff]
        %v147 = vld [vmem:[%s142 + $0x8] sm:$0xff]
        %v148 = vld [vmem:[%s142 + $0x10] sm:$0xff]
        %v149 = vld [vmem:[%s142 + $0x18] sm:$0xff]
        %151 = vset.pattern.permute.xlu0 0
        %152 = vperm.xlu0 %151, %v146
        %v153 = vpop.permute.xlu0 %152
        %156 = vset.pattern.permute.xlu0 0
        %157 = vperm.xlu0 %156, %v147
        %v158 = vpop.permute.xlu0 %157
        %161 = vset.pattern.permute.xlu0 0
        %162 = vperm.xlu0 %161, %v148
        %v163 = vpop.permute.xlu0 %162
        %166 = vset.pattern.permute.xlu0 0
        %167 = vperm.xlu0 %166, %v149
        %v168 = vpop.permute.xlu0 %167
        %v171 = vlaneseq
        %v172 = vshrl.u32 %v171, 7
        %v173 = vsub.s32 0, %v172
        %v174 = vrot.slane %v145, %v173
        %v176 = vmul.f32 %v153, %v174
        %v177 = vmul.f32 %v158, %v174
        %v178 = vmul.f32 %v163, %v174
        %v179 = vmul.f32 %v168, %v174
        %v180 = vand.u32 2147483647, %v176
        %vm181 = vcmp.le.f32.partialorder %v180, 0.7853982
        %vm182 = vcmp.lt.s32.totalorder %v176, 0
        %v183 = vand.u32 %v176, 2139095040
        %v184 = vshrl.u32 %v183, 23
        %v185 = vsub.s32 %v184, 127
        %v186 = vand.u32 2147483647, %v176
        %v187 = vand.u32 %v186, 8388607
        %v188 = vor.u32 %v187, 8388608
        %v189 = vsub.s32 0, %v188
        %v190 = vadd.s32 %v185, 1
        %vm191 = vcmp.gt.s32.totalorder %v190, 0
        %v192 = vsel %vm191, %v190, 0
        %v193 = vshrl.u32 %v192, 5
        %v194 = vand.u32 %v192, 31
        %v195 = vsub.s32 32, %v194
        %v196 = vshrl.u32 683565275, %v195
        %v197 = vshll.u32 683565275, %v194
        %v198 = vshrl.u32 2475754826, %v195
        %v199 = vor.u32 %v197, %v198
        %v200 = vshll.u32 2475754826, %v194
        %v201 = vshrl.u32 2131351028, %v195
        %v202 = vor.u32 %v200, %v201
        %v203 = vshll.u32 2131351028, %v194
        %v204 = vshrl.u32 2102212464, %v195
        %v205 = vor.u32 %v203, %v204
        %v206 = vshll.u32 2102212464, %v194
        %v207 = vshrl.u32 920167782, %v195
        %v208 = vor.u32 %v206, %v207
        %v209 = vshll.u32 920167782, %v194
        %v210 = vshrl.u32 1326507024, %v195
        %v211 = vor.u32 %v209, %v210
        %vm212 = vcmp.lt.s32.totalorder %v193, 1
        %vm213 = vcmp.lt.s32.totalorder %v193, 2
        %vm214 = vcmp.lt.s32.totalorder %v193, 3
        %vm215 = vcmp.lt.s32.totalorder %v193, 4
        %v216 = vsel %vm212, %v196, %v199
        %v217 = vsel %vm215, %v205, 2102212464
        %v218 = vsel %vm214, %v202, %v217
        %v219 = vsel %vm213, %v216, %v218
        %v220 = vsel %vm212, %v199, %v202
        %v221 = vsel %vm215, %v208, 920167782
        %v222 = vsel %vm214, %v205, %v221
        %v223 = vsel %vm213, %v220, %v222
        %v224 = vsel %vm212, %v202, %v205
        %v225 = vsel %vm215, %v211, 1326507024
        %v226 = vsel %vm214, %v208, %v225
        %v227 = vsel %vm213, %v224, %v226
        %v228 = vshll.u32 %v188, 8
        %v229 = vmul.u32.u64.compose %v228, %v227
        %v230 = vextract.low.u32 %v229
        %v231 = vextract.high.u32 %v229
        %v232 = vmul.u32.u64.compose %v228, %v223
        %v233 = vextract.low.u32 %v232
        %v234 = vextract.high.u32 %v232
        %v235 = vmul.u32 %v228, %v219
        %v236 = vadd.s32 %v231, %v233
        %vm237 = vc.u32 %v231, %v233
        %v238 = vadd.s32 %v234, 1
        %v239 = vsel %vm237, %v238, %v234
        %v240 = vadd.s32 %v235, %v239
        %v241 = vadd.s32 %v240, 536870912
        %v242 = vshrl.u32 %v241, 30
        %v243 = vshll.u32 %v242, 30
        %v244 = vsub.s32 %v240, %v243
        %vm245 = vcmp.lt.s32.totalorder %v244, 0
        %v246 = vsub.s32 0, %v244
        %v247 = vsel %vm245, %v246, %v244
        %v248 = vclz %v247
        %v249 = vsub.s32 %v248, 2
        %vm250 = vcmp.gt.s32.totalorder 0, %v249
        %v251 = vsel %vm250, 0, %v249
        %v252 = vsub.s32 32, %v251
        %v253 = vshll.u32 %v244, %v251
        %v254 = vshrl.u32 %v236, %v252
        %v255 = vor.u32 %v253, %v254
        %v256 = vsub.s32 4294967266, %v251
        %v257 = vadd.s32 %v256, 127
        %v258 = vshll.u32 %v257, 23
        %v259 = vor.u32 4788187, %v258
        %v260 = vand.u32 2147483647, %v259
        %v262 = vcvt.s32.f32 %v255
        %v263 = vmul.f32 %v262, %v260
        %v264 = vxor.u32 %v263, 2147483648
        %v265 = vsel %vm182, %v264, %v263
        %v266 = vsub.s32 4, %v242
        %v267 = vsel %vm182, %v266, %v242
        %v268 = vsel %vm181, %v176, %v265
        %v269 = vsel %vm181, 0, %v267
        %v270 = vcosq.f32.pop %v268
        %v271 = vsinq.f32.pop %v268
        %vm272 = vweird.f32 %v176
        %v273 = vadd.s32 %v269, 3
        %v274 = vand.u32 %v273, 3
        %vm275 = vcmp.lt.s32.totalorder %v274, 2
        %vm276 = vcmp.eq.s32.totalorder %v274, 0
        %v277 = vxor.u32 %v271, 2147483648
        %v278 = vsel %vm276, %v270, %v277
        %vm279 = vcmp.eq.s32.totalorder %v274, 2
        %v280 = vxor.u32 %v270, 2147483648
        %v281 = vsel %vm279, %v280, %v271
        %v282 = vsel %vm275, %v278, %v281
        %v283 = vsel %vm272, nan, %v282
        %v284 = vand.u32 2147483647, %v177
        %vm285 = vcmp.le.f32.partialorder %v284, 0.7853982
        %vm286 = vcmp.lt.s32.totalorder %v177, 0
        %v287 = vand.u32 %v177, 2139095040
        %v288 = vshrl.u32 %v287, 23
        %v289 = vsub.s32 %v288, 127
        %v290 = vand.u32 2147483647, %v177
        %v291 = vand.u32 %v290, 8388607
        %v292 = vor.u32 %v291, 8388608
        %v293 = vsub.s32 0, %v292
        %v294 = vadd.s32 %v289, 1
        %vm295 = vcmp.gt.s32.totalorder %v294, 0
        %v296 = vsel %vm295, %v294, 0
        %v297 = vshrl.u32 %v296, 5
        %v298 = vand.u32 %v296, 31
        %v299 = vsub.s32 32, %v298
        %v300 = vshrl.u32 683565275, %v299
        %v301 = vshll.u32 683565275, %v298
        %v302 = vshrl.u32 2475754826, %v299
        %v303 = vor.u32 %v301, %v302
        %v304 = vshll.u32 2475754826, %v298
        %v305 = vshrl.u32 2131351028, %v299
        %v306 = vor.u32 %v304, %v305
        %v307 = vshll.u32 2131351028, %v298
        %v308 = vshrl.u32 2102212464, %v299
        %v309 = vor.u32 %v307, %v308
        %v310 = vshll.u32 2102212464, %v298
        %v311 = vshrl.u32 920167782, %v299
        %v312 = vor.u32 %v310, %v311
        %v313 = vshll.u32 920167782, %v298
        %v314 = vshrl.u32 1326507024, %v299
        %v315 = vor.u32 %v313, %v314
        %vm316 = vcmp.lt.s32.totalorder %v297, 1
        %vm317 = vcmp.lt.s32.totalorder %v297, 2
        %vm318 = vcmp.lt.s32.totalorder %v297, 3
        %vm319 = vcmp.lt.s32.totalorder %v297, 4
        %v320 = vsel %vm316, %v300, %v303
        %v321 = vsel %vm319, %v309, 2102212464
        %v322 = vsel %vm318, %v306, %v321
        %v323 = vsel %vm317, %v320, %v322
        %v324 = vsel %vm316, %v303, %v306
        %v325 = vsel %vm319, %v312, 920167782
        %v326 = vsel %vm318, %v309, %v325
        %v327 = vsel %vm317, %v324, %v326
        %v328 = vsel %vm316, %v306, %v309
        %v329 = vsel %vm319, %v315, 1326507024
        %v330 = vsel %vm318, %v312, %v329
        %v331 = vsel %vm317, %v328, %v330
        %v332 = vshll.u32 %v292, 8
        %v333 = vmul.u32.u64.compose %v332, %v331
        %v334 = vextract.low.u32 %v333
        %v335 = vextract.high.u32 %v333
        %v336 = vmul.u32.u64.compose %v332, %v327
        %v337 = vextract.low.u32 %v336
        %v338 = vextract.high.u32 %v336
        %v339 = vmul.u32 %v332, %v323
        %v340 = vadd.s32 %v335, %v337
        %vm341 = vc.u32 %v335, %v337
        %v342 = vadd.s32 %v338, 1
        %v343 = vsel %vm341, %v342, %v338
        %v344 = vadd.s32 %v339, %v343
        %v345 = vadd.s32 %v344, 536870912
        %v346 = vshrl.u32 %v345, 30
        %v347 = vshll.u32 %v346, 30
        %v348 = vsub.s32 %v344, %v347
        %vm349 = vcmp.lt.s32.totalorder %v348, 0
        %v350 = vsub.s32 0, %v348
        %v351 = vsel %vm349, %v350, %v348
        %v352 = vclz %v351
        %v353 = vsub.s32 %v352, 2
        %vm354 = vcmp.gt.s32.totalorder 0, %v353
        %v355 = vsel %vm354, 0, %v353
        %v356 = vsub.s32 32, %v355
        %v357 = vshll.u32 %v348, %v355
        %v358 = vshrl.u32 %v340, %v356
        %v359 = vor.u32 %v357, %v358
        %v360 = vsub.s32 4294967266, %v355
        %v361 = vadd.s32 %v360, 127
        %v362 = vshll.u32 %v361, 23
        %v363 = vor.u32 4788187, %v362
        %v364 = vand.u32 2147483647, %v363
        %v366 = vcvt.s32.f32 %v359
        %v367 = vmul.f32 %v366, %v364
        %v368 = vxor.u32 %v367, 2147483648
        %v369 = vsel %vm286, %v368, %v367
        %v370 = vsub.s32 4, %v346
        %v371 = vsel %vm286, %v370, %v346
        %v372 = vsel %vm285, %v177, %v369
        %v373 = vsel %vm285, 0, %v371
        %v374 = vcosq.f32.pop %v372
        %v375 = vsinq.f32.pop %v372
        %vm376 = vweird.f32 %v177
        %v377 = vadd.s32 %v373, 3
        %v378 = vand.u32 %v377, 3
        %vm379 = vcmp.lt.s32.totalorder %v378, 2
        %vm380 = vcmp.eq.s32.totalorder %v378, 0
        %v381 = vxor.u32 %v375, 2147483648
        %v382 = vsel %vm380, %v374, %v381
        %vm383 = vcmp.eq.s32.totalorder %v378, 2
        %v384 = vxor.u32 %v374, 2147483648
        %v385 = vsel %vm383, %v384, %v375
        %v386 = vsel %vm379, %v382, %v385
        %v387 = vsel %vm376, nan, %v386
        %v388 = vand.u32 2147483647, %v178
        %vm389 = vcmp.le.f32.partialorder %v388, 0.7853982
        %vm390 = vcmp.lt.s32.totalorder %v178, 0
        %v391 = vand.u32 %v178, 2139095040
        %v392 = vshrl.u32 %v391, 23
        %v393 = vsub.s32 %v392, 127
        %v394 = vand.u32 2147483647, %v178
        %v395 = vand.u32 %v394, 8388607
        %v396 = vor.u32 %v395, 8388608
        %v397 = vsub.s32 0, %v396
        %v398 = vadd.s32 %v393, 1
        %vm399 = vcmp.gt.s32.totalorder %v398, 0
        %v400 = vsel %vm399, %v398, 0
        %v401 = vshrl.u32 %v400, 5
        %v402 = vand.u32 %v400, 31
        %v403 = vsub.s32 32, %v402
        %v404 = vshrl.u32 683565275, %v403
        %v405 = vshll.u32 683565275, %v402
        %v406 = vshrl.u32 2475754826, %v403
        %v407 = vor.u32 %v405, %v406
        %v408 = vshll.u32 2475754826, %v402
        %v409 = vshrl.u32 2131351028, %v403
        %v410 = vor.u32 %v408, %v409
        %v411 = vshll.u32 2131351028, %v402
        %v412 = vshrl.u32 2102212464, %v403
        %v413 = vor.u32 %v411, %v412
        %v414 = vshll.u32 2102212464, %v402
        %v415 = vshrl.u32 920167782, %v403
        %v416 = vor.u32 %v414, %v415
        %v417 = vshll.u32 920167782, %v402
        %v418 = vshrl.u32 1326507024, %v403
        %v419 = vor.u32 %v417, %v418
        %vm420 = vcmp.lt.s32.totalorder %v401, 1
        %vm421 = vcmp.lt.s32.totalorder %v401, 2
        %vm422 = vcmp.lt.s32.totalorder %v401, 3
        %vm423 = vcmp.lt.s32.totalorder %v401, 4
        %v424 = vsel %vm420, %v404, %v407
        %v425 = vsel %vm423, %v413, 2102212464
        %v426 = vsel %vm422, %v410, %v425
        %v427 = vsel %vm421, %v424, %v426
        %v428 = vsel %vm420, %v407, %v410
        %v429 = vsel %vm423, %v416, 920167782
        %v430 = vsel %vm422, %v413, %v429
        %v431 = vsel %vm421, %v428, %v430
        %v432 = vsel %vm420, %v410, %v413
        %v433 = vsel %vm423, %v419, 1326507024
        %v434 = vsel %vm422, %v416, %v433
        %v435 = vsel %vm421, %v432, %v434
        %v436 = vshll.u32 %v396, 8
        %v437 = vmul.u32.u64.compose %v436, %v435
        %v438 = vextract.low.u32 %v437
        %v439 = vextract.high.u32 %v437
        %v440 = vmul.u32.u64.compose %v436, %v431
        %v441 = vextract.low.u32 %v440
        %v442 = vextract.high.u32 %v440
        %v443 = vmul.u32 %v436, %v427
        %v444 = vadd.s32 %v439, %v441
        %vm445 = vc.u32 %v439, %v441
        %v446 = vadd.s32 %v442, 1
        %v447 = vsel %vm445, %v446, %v442
        %v448 = vadd.s32 %v443, %v447
        %v449 = vadd.s32 %v448, 536870912
        %v450 = vshrl.u32 %v449, 30
        %v451 = vshll.u32 %v450, 30
        %v452 = vsub.s32 %v448, %v451
        %vm453 = vcmp.lt.s32.totalorder %v452, 0
        %v454 = vsub.s32 0, %v452
        %v455 = vsel %vm453, %v454, %v452
        %v456 = vclz %v455
        %v457 = vsub.s32 %v456, 2
        %vm458 = vcmp.gt.s32.totalorder 0, %v457
        %v459 = vsel %vm458, 0, %v457
        %v460 = vsub.s32 32, %v459
        %v461 = vshll.u32 %v452, %v459
        %v462 = vshrl.u32 %v444, %v460
        %v463 = vor.u32 %v461, %v462
        %v464 = vsub.s32 4294967266, %v459
        %v465 = vadd.s32 %v464, 127
        %v466 = vshll.u32 %v465, 23
        %v467 = vor.u32 4788187, %v466
        %v468 = vand.u32 2147483647, %v467
        %v470 = vcvt.s32.f32 %v463
        %v471 = vmul.f32 %v470, %v468
        %v472 = vxor.u32 %v471, 2147483648
        %v473 = vsel %vm390, %v472, %v471
        %v474 = vsub.s32 4, %v450
        %v475 = vsel %vm390, %v474, %v450
        %v476 = vsel %vm389, %v178, %v473
        %v477 = vsel %vm389, 0, %v475
        %v478 = vcosq.f32.pop %v476
        %v479 = vsinq.f32.pop %v476
        %vm480 = vweird.f32 %v178
        %v481 = vadd.s32 %v477, 3
        %v482 = vand.u32 %v481, 3
        %vm483 = vcmp.lt.s32.totalorder %v482, 2
        %vm484 = vcmp.eq.s32.totalorder %v482, 0
        %v485 = vxor.u32 %v479, 2147483648
        %v486 = vsel %vm484, %v478, %v485
        %vm487 = vcmp.eq.s32.totalorder %v482, 2
        %v488 = vxor.u32 %v478, 2147483648
        %v489 = vsel %vm487, %v488, %v479
        %v490 = vsel %vm483, %v486, %v489
        %v491 = vsel %vm480, nan, %v490
        %v492 = vand.u32 2147483647, %v179
        %vm493 = vcmp.le.f32.partialorder %v492, 0.7853982
        %vm494 = vcmp.lt.s32.totalorder %v179, 0
        %v495 = vand.u32 %v179, 2139095040
        %v496 = vshrl.u32 %v495, 23
        %v497 = vsub.s32 %v496, 127
        %v498 = vand.u32 2147483647, %v179
        %v499 = vand.u32 %v498, 8388607
        %v500 = vor.u32 %v499, 8388608
        %v501 = vsub.s32 0, %v500
        %v502 = vadd.s32 %v497, 1
        %vm503 = vcmp.gt.s32.totalorder %v502, 0
        %v504 = vsel %vm503, %v502, 0
        %v505 = vshrl.u32 %v504, 5
        %v506 = vand.u32 %v504, 31
        %v507 = vsub.s32 32, %v506
        %v508 = vshrl.u32 683565275, %v507
        %v509 = vshll.u32 683565275, %v506
        %v510 = vshrl.u32 2475754826, %v507
        %v511 = vor.u32 %v509, %v510
        %v512 = vshll.u32 2475754826, %v506
        %v513 = vshrl.u32 2131351028, %v507
        %v514 = vor.u32 %v512, %v513
        %v515 = vshll.u32 2131351028, %v506
        %v516 = vshrl.u32 2102212464, %v507
        %v517 = vor.u32 %v515, %v516
        %v518 = vshll.u32 2102212464, %v506
        %v519 = vshrl.u32 920167782, %v507
        %v520 = vor.u32 %v518, %v519
        %v521 = vshll.u32 920167782, %v506
        %v522 = vshrl.u32 1326507024, %v507
        %v523 = vor.u32 %v521, %v522
        %vm524 = vcmp.lt.s32.totalorder %v505, 1
        %vm525 = vcmp.lt.s32.totalorder %v505, 2
        %vm526 = vcmp.lt.s32.totalorder %v505, 3
        %vm527 = vcmp.lt.s32.totalorder %v505, 4
        %v528 = vsel %vm524, %v508, %v511
        %v529 = vsel %vm527, %v517, 2102212464
        %v530 = vsel %vm526, %v514, %v529
        %v531 = vsel %vm525, %v528, %v530
        %v532 = vsel %vm524, %v511, %v514
        %v533 = vsel %vm527, %v520, 920167782
        %v534 = vsel %vm526, %v517, %v533
        %v535 = vsel %vm525, %v532, %v534
        %v536 = vsel %vm524, %v514, %v517
        %v537 = vsel %vm527, %v523, 1326507024
        %v538 = vsel %vm526, %v520, %v537
        %v539 = vsel %vm525, %v536, %v538
        %v540 = vshll.u32 %v500, 8
        %v541 = vmul.u32.u64.compose %v540, %v539
        %v542 = vextract.low.u32 %v541
        %v543 = vextract.high.u32 %v541
        %v544 = vmul.u32.u64.compose %v540, %v535
        %v545 = vextract.low.u32 %v544
        %v546 = vextract.high.u32 %v544
        %v547 = vmul.u32 %v540, %v531
        %v548 = vadd.s32 %v543, %v545
        %vm549 = vc.u32 %v543, %v545
        %v550 = vadd.s32 %v546, 1
        %v551 = vsel %vm549, %v550, %v546
        %v552 = vadd.s32 %v547, %v551
        %v553 = vadd.s32 %v552, 536870912
        %v554 = vshrl.u32 %v553, 30
        %v555 = vshll.u32 %v554, 30
        %v556 = vsub.s32 %v552, %v555
        %vm557 = vcmp.lt.s32.totalorder %v556, 0
        %v558 = vsub.s32 0, %v556
        %v559 = vsel %vm557, %v558, %v556
        %v560 = vclz %v559
        %v561 = vsub.s32 %v560, 2
        %vm562 = vcmp.gt.s32.totalorder 0, %v561
        %v563 = vsel %vm562, 0, %v561
        %v564 = vsub.s32 32, %v563
        %v565 = vshll.u32 %v556, %v563
        %v566 = vshrl.u32 %v548, %v564
        %v567 = vor.u32 %v565, %v566
        %v568 = vsub.s32 4294967266, %v563
        %v569 = vadd.s32 %v568, 127
        %v570 = vshll.u32 %v569, 23
        %v571 = vor.u32 4788187, %v570
        %v572 = vand.u32 2147483647, %v571
        %v574 = vcvt.s32.f32 %v567
        %v575 = vmul.f32 %v574, %v572
        %v576 = vxor.u32 %v575, 2147483648
        %v577 = vsel %vm494, %v576, %v575
        %v578 = vsub.s32 4, %v554
        %v579 = vsel %vm494, %v578, %v554
        %v580 = vsel %vm493, %v179, %v577
        %v581 = vsel %vm493, 0, %v579
        %v582 = vcosq.f32.pop %v580
        %v583 = vsinq.f32.pop %v580
        %vm584 = vweird.f32 %v179
        %v585 = vadd.s32 %v581, 3
        %v586 = vand.u32 %v585, 3
        %vm587 = vcmp.lt.s32.totalorder %v586, 2
        %vm588 = vcmp.eq.s32.totalorder %v586, 0
        %v589 = vxor.u32 %v583, 2147483648
        %v590 = vsel %vm588, %v582, %v589
        %vm591 = vcmp.eq.s32.totalorder %v586, 2
        %v592 = vxor.u32 %v582, 2147483648
        %v593 = vsel %vm591, %v592, %v583
        %v594 = vsel %vm587, %v590, %v593
        %v595 = vsel %vm584, nan, %v594
        %596 = vst [vmem:[%s137] sm:$0xff] %v283
        %597 = vst [vmem:[%s137 + $0x10] sm:$0xff] %v387
        %598 = vst [vmem:[%s137 + $0x20] sm:$0xff] %v491
        %599 = vst [vmem:[%s137 + $0x30] sm:$0xff] %v595
        %v600 = vand.u32 2147483647, %v176
        %vm601 = vcmp.le.f32.partialorder %v600, 0.7853982
        %vm602 = vcmp.lt.s32.totalorder %v176, 0
        %v603 = vand.u32 %v176, 2139095040
        %v604 = vshrl.u32 %v603, 23
        %v605 = vsub.s32 %v604, 127
        %v606 = vand.u32 2147483647, %v176
        %v607 = vand.u32 %v606, 8388607
        %v608 = vor.u32 %v607, 8388608
        %v609 = vsub.s32 0, %v608
        %v610 = vadd.s32 %v605, 1
        %vm611 = vcmp.gt.s32.totalorder %v610, 0
        %v612 = vsel %vm611, %v610, 0
        %v613 = vshrl.u32 %v612, 5
        %v614 = vand.u32 %v612, 31
        %v615 = vsub.s32 32, %v614
        %v616 = vshrl.u32 683565275, %v615
        %v617 = vshll.u32 683565275, %v614
        %v618 = vshrl.u32 2475754826, %v615
        %v619 = vor.u32 %v617, %v618
        %v620 = vshll.u32 2475754826, %v614
        %v621 = vshrl.u32 2131351028, %v615
        %v622 = vor.u32 %v620, %v621
        %v623 = vshll.u32 2131351028, %v614
        %v624 = vshrl.u32 2102212464, %v615
        %v625 = vor.u32 %v623, %v624
        %v626 = vshll.u32 2102212464, %v614
        %v627 = vshrl.u32 920167782, %v615
        %v628 = vor.u32 %v626, %v627
        %v629 = vshll.u32 920167782, %v614
        %v630 = vshrl.u32 1326507024, %v615
        %v631 = vor.u32 %v629, %v630
        %vm632 = vcmp.lt.s32.totalorder %v613, 1
        %vm633 = vcmp.lt.s32.totalorder %v613, 2
        %vm634 = vcmp.lt.s32.totalorder %v613, 3
        %vm635 = vcmp.lt.s32.totalorder %v613, 4
        %v636 = vsel %vm632, %v616, %v619
        %v637 = vsel %vm635, %v625, 2102212464
        %v638 = vsel %vm634, %v622, %v637
        %v639 = vsel %vm633, %v636, %v638
        %v640 = vsel %vm632, %v619, %v622
        %v641 = vsel %vm635, %v628, 920167782
        %v642 = vsel %vm634, %v625, %v641
        %v643 = vsel %vm633, %v640, %v642
        %v644 = vsel %vm632, %v622, %v625
        %v645 = vsel %vm635, %v631, 1326507024
        %v646 = vsel %vm634, %v628, %v645
        %v647 = vsel %vm633, %v644, %v646
        %v648 = vshll.u32 %v608, 8
        %v649 = vmul.u32.u64.compose %v648, %v647
        %v650 = vextract.low.u32 %v649
        %v651 = vextract.high.u32 %v649
        %v652 = vmul.u32.u64.compose %v648, %v643
        %v653 = vextract.low.u32 %v652
        %v654 = vextract.high.u32 %v652
        %v655 = vmul.u32 %v648, %v639
        %v656 = vadd.s32 %v651, %v653
        %vm657 = vc.u32 %v651, %v653
        %v658 = vadd.s32 %v654, 1
        %v659 = vsel %vm657, %v658, %v654
        %v660 = vadd.s32 %v655, %v659
        %v661 = vadd.s32 %v660, 536870912
        %v662 = vshrl.u32 %v661, 30
        %v663 = vshll.u32 %v662, 30
        %v664 = vsub.s32 %v660, %v663
        %vm665 = vcmp.lt.s32.totalorder %v664, 0
        %v666 = vsub.s32 0, %v664
        %v667 = vsel %vm665, %v666, %v664
        %v668 = vclz %v667
        %v669 = vsub.s32 %v668, 2
        %vm670 = vcmp.gt.s32.totalorder 0, %v669
        %v671 = vsel %vm670, 0, %v669
        %v672 = vsub.s32 32, %v671
        %v673 = vshll.u32 %v664, %v671
        %v674 = vshrl.u32 %v656, %v672
        %v675 = vor.u32 %v673, %v674
        %v676 = vsub.s32 4294967266, %v671
        %v677 = vadd.s32 %v676, 127
        %v678 = vshll.u32 %v677, 23
        %v679 = vor.u32 4788187, %v678
        %v680 = vand.u32 2147483647, %v679
        %v682 = vcvt.s32.f32 %v675
        %v683 = vmul.f32 %v682, %v680
        %v684 = vxor.u32 %v683, 2147483648
        %v685 = vsel %vm602, %v684, %v683
        %v686 = vsub.s32 4, %v662
        %v687 = vsel %vm602, %v686, %v662
        %v688 = vsel %vm601, %v176, %v685
        %v689 = vsel %vm601, 0, %v687
        %v690 = vcosq.f32.pop %v688
        %v691 = vsinq.f32.pop %v688
        %vm692 = vweird.f32 %v176
        %v693 = vand.u32 %v689, 3
        %vm694 = vcmp.lt.s32.totalorder %v693, 2
        %vm695 = vcmp.eq.s32.totalorder %v693, 0
        %v696 = vxor.u32 %v691, 2147483648
        %v697 = vsel %vm695, %v690, %v696
        %vm698 = vcmp.eq.s32.totalorder %v693, 2
        %v699 = vxor.u32 %v690, 2147483648
        %v700 = vsel %vm698, %v699, %v691
        %v701 = vsel %vm694, %v697, %v700
        %v702 = vsel %vm692, nan, %v701
        %v703 = vand.u32 2147483647, %v177
        %vm704 = vcmp.le.f32.partialorder %v703, 0.7853982
        %vm705 = vcmp.lt.s32.totalorder %v177, 0
        %v706 = vand.u32 %v177, 2139095040
        %v707 = vshrl.u32 %v706, 23
        %v708 = vsub.s32 %v707, 127
        %v709 = vand.u32 2147483647, %v177
        %v710 = vand.u32 %v709, 8388607
        %v711 = vor.u32 %v710, 8388608
        %v712 = vsub.s32 0, %v711
        %v713 = vadd.s32 %v708, 1
        %vm714 = vcmp.gt.s32.totalorder %v713, 0
        %v715 = vsel %vm714, %v713, 0
        %v716 = vshrl.u32 %v715, 5
        %v717 = vand.u32 %v715, 31
        %v718 = vsub.s32 32, %v717
        %v719 = vshrl.u32 683565275, %v718
        %v720 = vshll.u32 683565275, %v717
        %v721 = vshrl.u32 2475754826, %v718
        %v722 = vor.u32 %v720, %v721
        %v723 = vshll.u32 2475754826, %v717
        %v724 = vshrl.u32 2131351028, %v718
        %v725 = vor.u32 %v723, %v724
        %v726 = vshll.u32 2131351028, %v717
        %v727 = vshrl.u32 2102212464, %v718
        %v728 = vor.u32 %v726, %v727
        %v729 = vshll.u32 2102212464, %v717
        %v730 = vshrl.u32 920167782, %v718
        %v731 = vor.u32 %v729, %v730
        %v732 = vshll.u32 920167782, %v717
        %v733 = vshrl.u32 1326507024, %v718
        %v734 = vor.u32 %v732, %v733
        %vm735 = vcmp.lt.s32.totalorder %v716, 1
        %vm736 = vcmp.lt.s32.totalorder %v716, 2
        %vm737 = vcmp.lt.s32.totalorder %v716, 3
        %vm738 = vcmp.lt.s32.totalorder %v716, 4
        %v739 = vsel %vm735, %v719, %v722
        %v740 = vsel %vm738, %v728, 2102212464
        %v741 = vsel %vm737, %v725, %v740
        %v742 = vsel %vm736, %v739, %v741
        %v743 = vsel %vm735, %v722, %v725
        %v744 = vsel %vm738, %v731, 920167782
        %v745 = vsel %vm737, %v728, %v744
        %v746 = vsel %vm736, %v743, %v745
        %v747 = vsel %vm735, %v725, %v728
        %v748 = vsel %vm738, %v734, 1326507024
        %v749 = vsel %vm737, %v731, %v748
        %v750 = vsel %vm736, %v747, %v749
        %v751 = vshll.u32 %v711, 8
        %v752 = vmul.u32.u64.compose %v751, %v750
        %v753 = vextract.low.u32 %v752
        %v754 = vextract.high.u32 %v752
        %v755 = vmul.u32.u64.compose %v751, %v746
        %v756 = vextract.low.u32 %v755
        %v757 = vextract.high.u32 %v755
        %v758 = vmul.u32 %v751, %v742
        %v759 = vadd.s32 %v754, %v756
        %vm760 = vc.u32 %v754, %v756
        %v761 = vadd.s32 %v757, 1
        %v762 = vsel %vm760, %v761, %v757
        %v763 = vadd.s32 %v758, %v762
        %v764 = vadd.s32 %v763, 536870912
        %v765 = vshrl.u32 %v764, 30
        %v766 = vshll.u32 %v765, 30
        %v767 = vsub.s32 %v763, %v766
        %vm768 = vcmp.lt.s32.totalorder %v767, 0
        %v769 = vsub.s32 0, %v767
        %v770 = vsel %vm768, %v769, %v767
        %v771 = vclz %v770
        %v772 = vsub.s32 %v771, 2
        %vm773 = vcmp.gt.s32.totalorder 0, %v772
        %v774 = vsel %vm773, 0, %v772
        %v775 = vsub.s32 32, %v774
        %v776 = vshll.u32 %v767, %v774
        %v777 = vshrl.u32 %v759, %v775
        %v778 = vor.u32 %v776, %v777
        %v779 = vsub.s32 4294967266, %v774
        %v780 = vadd.s32 %v779, 127
        %v781 = vshll.u32 %v780, 23
        %v782 = vor.u32 4788187, %v781
        %v783 = vand.u32 2147483647, %v782
        %v785 = vcvt.s32.f32 %v778
        %v786 = vmul.f32 %v785, %v783
        %v787 = vxor.u32 %v786, 2147483648
        %v788 = vsel %vm705, %v787, %v786
        %v789 = vsub.s32 4, %v765
        %v790 = vsel %vm705, %v789, %v765
        %v791 = vsel %vm704, %v177, %v788
        %v792 = vsel %vm704, 0, %v790
        %v793 = vcosq.f32.pop %v791
        %v794 = vsinq.f32.pop %v791
        %vm795 = vweird.f32 %v177
        %v796 = vand.u32 %v792, 3
        %vm797 = vcmp.lt.s32.totalorder %v796, 2
        %vm798 = vcmp.eq.s32.totalorder %v796, 0
        %v799 = vxor.u32 %v794, 2147483648
        %v800 = vsel %vm798, %v793, %v799
        %vm801 = vcmp.eq.s32.totalorder %v796, 2
        %v802 = vxor.u32 %v793, 2147483648
        %v803 = vsel %vm801, %v802, %v794
        %v804 = vsel %vm797, %v800, %v803
        %v805 = vsel %vm795, nan, %v804
        %v806 = vand.u32 2147483647, %v178
        %vm807 = vcmp.le.f32.partialorder %v806, 0.7853982
        %vm808 = vcmp.lt.s32.totalorder %v178, 0
        %v809 = vand.u32 %v178, 2139095040
        %v810 = vshrl.u32 %v809, 23
        %v811 = vsub.s32 %v810, 127
        %v812 = vand.u32 2147483647, %v178
        %v813 = vand.u32 %v812, 8388607
        %v814 = vor.u32 %v813, 8388608
        %v815 = vsub.s32 0, %v814
        %v816 = vadd.s32 %v811, 1
        %vm817 = vcmp.gt.s32.totalorder %v816, 0
        %v818 = vsel %vm817, %v816, 0
        %v819 = vshrl.u32 %v818, 5
        %v820 = vand.u32 %v818, 31
        %v821 = vsub.s32 32, %v820
        %v822 = vshrl.u32 683565275, %v821
        %v823 = vshll.u32 683565275, %v820
        %v824 = vshrl.u32 2475754826, %v821
        %v825 = vor.u32 %v823, %v824
        %v826 = vshll.u32 2475754826, %v820
        %v827 = vshrl.u32 2131351028, %v821
        %v828 = vor.u32 %v826, %v827
        %v829 = vshll.u32 2131351028, %v820
        %v830 = vshrl.u32 2102212464, %v821
        %v831 = vor.u32 %v829, %v830
        %v832 = vshll.u32 2102212464, %v820
        %v833 = vshrl.u32 920167782, %v821
        %v834 = vor.u32 %v832, %v833
        %v835 = vshll.u32 920167782, %v820
        %v836 = vshrl.u32 1326507024, %v821
        %v837 = vor.u32 %v835, %v836
        %vm838 = vcmp.lt.s32.totalorder %v819, 1
        %vm839 = vcmp.lt.s32.totalorder %v819, 2
        %vm840 = vcmp.lt.s32.totalorder %v819, 3
        %vm841 = vcmp.lt.s32.totalorder %v819, 4
        %v842 = vsel %vm838, %v822, %v825
        %v843 = vsel %vm841, %v831, 2102212464
        %v844 = vsel %vm840, %v828, %v843
        %v845 = vsel %vm839, %v842, %v844
        %v846 = vsel %vm838, %v825, %v828
        %v847 = vsel %vm841, %v834, 920167782
        %v848 = vsel %vm840, %v831, %v847
        %v849 = vsel %vm839, %v846, %v848
        %v850 = vsel %vm838, %v828, %v831
        %v851 = vsel %vm841, %v837, 1326507024
        %v852 = vsel %vm840, %v834, %v851
        %v853 = vsel %vm839, %v850, %v852
        %v854 = vshll.u32 %v814, 8
        %v855 = vmul.u32.u64.compose %v854, %v853
        %v856 = vextract.low.u32 %v855
        %v857 = vextract.high.u32 %v855
        %v858 = vmul.u32.u64.compose %v854, %v849
        %v859 = vextract.low.u32 %v858
        %v860 = vextract.high.u32 %v858
        %v861 = vmul.u32 %v854, %v845
        %v862 = vadd.s32 %v857, %v859
        %vm863 = vc.u32 %v857, %v859
        %v864 = vadd.s32 %v860, 1
        %v865 = vsel %vm863, %v864, %v860
        %v866 = vadd.s32 %v861, %v865
        %v867 = vadd.s32 %v866, 536870912
        %v868 = vshrl.u32 %v867, 30
        %v869 = vshll.u32 %v868, 30
        %v870 = vsub.s32 %v866, %v869
        %vm871 = vcmp.lt.s32.totalorder %v870, 0
        %v872 = vsub.s32 0, %v870
        %v873 = vsel %vm871, %v872, %v870
        %v874 = vclz %v873
        %v875 = vsub.s32 %v874, 2
        %vm876 = vcmp.gt.s32.totalorder 0, %v875
        %v877 = vsel %vm876, 0, %v875
        %v878 = vsub.s32 32, %v877
        %v879 = vshll.u32 %v870, %v877
        %v880 = vshrl.u32 %v862, %v878
        %v881 = vor.u32 %v879, %v880
        %v882 = vsub.s32 4294967266, %v877
        %v883 = vadd.s32 %v882, 127
        %v884 = vshll.u32 %v883, 23
        %v885 = vor.u32 4788187, %v884
        %v886 = vand.u32 2147483647, %v885
        %v888 = vcvt.s32.f32 %v881
        %v889 = vmul.f32 %v888, %v886
        %v890 = vxor.u32 %v889, 2147483648
        %v891 = vsel %vm808, %v890, %v889
        %v892 = vsub.s32 4, %v868
        %v893 = vsel %vm808, %v892, %v868
        %v894 = vsel %vm807, %v178, %v891
        %v895 = vsel %vm807, 0, %v893
        %v896 = vcosq.f32.pop %v894
        %v897 = vsinq.f32.pop %v894
        %vm898 = vweird.f32 %v178
        %v899 = vand.u32 %v895, 3
        %vm900 = vcmp.lt.s32.totalorder %v899, 2
        %vm901 = vcmp.eq.s32.totalorder %v899, 0
        %v902 = vxor.u32 %v897, 2147483648
        %v903 = vsel %vm901, %v896, %v902
        %vm904 = vcmp.eq.s32.totalorder %v899, 2
        %v905 = vxor.u32 %v896, 2147483648
        %v906 = vsel %vm904, %v905, %v897
        %v907 = vsel %vm900, %v903, %v906
        %v908 = vsel %vm898, nan, %v907
        %v909 = vand.u32 2147483647, %v179
        %vm910 = vcmp.le.f32.partialorder %v909, 0.7853982
        %vm911 = vcmp.lt.s32.totalorder %v179, 0
        %v912 = vand.u32 %v179, 2139095040
        %v913 = vshrl.u32 %v912, 23
        %v914 = vsub.s32 %v913, 127
        %v915 = vand.u32 2147483647, %v179
        %v916 = vand.u32 %v915, 8388607
        %v917 = vor.u32 %v916, 8388608
        %v918 = vsub.s32 0, %v917
        %v919 = vadd.s32 %v914, 1
        %vm920 = vcmp.gt.s32.totalorder %v919, 0
        %v921 = vsel %vm920, %v919, 0
        %v922 = vshrl.u32 %v921, 5
        %v923 = vand.u32 %v921, 31
        %v924 = vsub.s32 32, %v923
        %v925 = vshrl.u32 683565275, %v924
        %v926 = vshll.u32 683565275, %v923
        %v927 = vshrl.u32 2475754826, %v924
        %v928 = vor.u32 %v926, %v927
        %v929 = vshll.u32 2475754826, %v923
        %v930 = vshrl.u32 2131351028, %v924
        %v931 = vor.u32 %v929, %v930
        %v932 = vshll.u32 2131351028, %v923
        %v933 = vshrl.u32 2102212464, %v924
        %v934 = vor.u32 %v932, %v933
        %v935 = vshll.u32 2102212464, %v923
        %v936 = vshrl.u32 920167782, %v924
        %v937 = vor.u32 %v935, %v936
        %v938 = vshll.u32 920167782, %v923
        %v939 = vshrl.u32 1326507024, %v924
        %v940 = vor.u32 %v938, %v939
        %vm941 = vcmp.lt.s32.totalorder %v922, 1
        %vm942 = vcmp.lt.s32.totalorder %v922, 2
        %vm943 = vcmp.lt.s32.totalorder %v922, 3
        %vm944 = vcmp.lt.s32.totalorder %v922, 4
        %v945 = vsel %vm941, %v925, %v928
        %v946 = vsel %vm944, %v934, 2102212464
        %v947 = vsel %vm943, %v931, %v946
        %v948 = vsel %vm942, %v945, %v947
        %v949 = vsel %vm941, %v928, %v931
        %v950 = vsel %vm944, %v937, 920167782
        %v951 = vsel %vm943, %v934, %v950
        %v952 = vsel %vm942, %v949, %v951
        %v953 = vsel %vm941, %v931, %v934
        %v954 = vsel %vm944, %v940, 1326507024
        %v955 = vsel %vm943, %v937, %v954
        %v956 = vsel %vm942, %v953, %v955
        %v957 = vshll.u32 %v917, 8
        %v958 = vmul.u32.u64.compose %v957, %v956
        %v959 = vextract.low.u32 %v958
        %v960 = vextract.high.u32 %v958
        %v961 = vmul.u32.u64.compose %v957, %v952
        %v962 = vextract.low.u32 %v961
        %v963 = vextract.high.u32 %v961
        %v964 = vmul.u32 %v957, %v948
        %v965 = vadd.s32 %v960, %v962
        %vm966 = vc.u32 %v960, %v962
        %v967 = vadd.s32 %v963, 1
        %v968 = vsel %vm966, %v967, %v963
        %v969 = vadd.s32 %v964, %v968
        %v970 = vadd.s32 %v969, 536870912
        %v971 = vshrl.u32 %v970, 30
        %v972 = vshll.u32 %v971, 30
        %v973 = vsub.s32 %v969, %v972
        %vm974 = vcmp.lt.s32.totalorder %v973, 0
        %v975 = vsub.s32 0, %v973
        %v976 = vsel %vm974, %v975, %v973
        %v977 = vclz %v976
        %v978 = vsub.s32 %v977, 2
        %vm979 = vcmp.gt.s32.totalorder 0, %v978
        %v980 = vsel %vm979, 0, %v978
        %v981 = vsub.s32 32, %v980
        %v982 = vshll.u32 %v973, %v980
        %v983 = vshrl.u32 %v965, %v981
        %v984 = vor.u32 %v982, %v983
        %v985 = vsub.s32 4294967266, %v980
        %v986 = vadd.s32 %v985, 127
        %v987 = vshll.u32 %v986, 23
        %v988 = vor.u32 4788187, %v987
        %v989 = vand.u32 2147483647, %v988
        %v991 = vcvt.s32.f32 %v984
        %v992 = vmul.f32 %v991, %v989
        %v993 = vxor.u32 %v992, 2147483648
        %v994 = vsel %vm911, %v993, %v992
        %v995 = vsub.s32 4, %v971
        %v996 = vsel %vm911, %v995, %v971
        %v997 = vsel %vm910, %v179, %v994
        %v998 = vsel %vm910, 0, %v996
        %v999 = vcosq.f32.pop %v997
        %v1000 = vsinq.f32.pop %v997
        %vm1001 = vweird.f32 %v179
        %v1002 = vand.u32 %v998, 3
        %vm1003 = vcmp.lt.s32.totalorder %v1002, 2
        %vm1004 = vcmp.eq.s32.totalorder %v1002, 0
        %v1005 = vxor.u32 %v1000, 2147483648
        %v1006 = vsel %vm1004, %v999, %v1005
        %vm1007 = vcmp.eq.s32.totalorder %v1002, 2
        %v1008 = vxor.u32 %v999, 2147483648
        %v1009 = vsel %vm1007, %v1008, %v1000
        %v1010 = vsel %vm1003, %v1006, %v1009
        %v1011 = vsel %vm1001, nan, %v1010
        %1012 = vst [vmem:[%s137 + $0x8] sm:$0xff] %v702
        %1013 = vst [vmem:[%s137 + $0x18] sm:$0xff] %v805
        %1014 = vst [vmem:[%s137 + $0x28] sm:$0xff] %v908
        %1015 = vst [vmem:[%s137 + $0x38] sm:$0xff] %v1011
        %s1016 = sand.u32 %s71, 1
        %s1017 = scalar_lea.sflag [#allocation3], %s1016
        %s1018 = sand.u32 %s71, 1
        %s1019 = smul.addr %s1018, 64
        %s1020 = scalar_lea.vmem [#allocation2], %s1019
        // Predicated region
        $region29: #{tpu_custom_call.1} parent=27 // pred_check
          %p1021 = pneg %p81
        $region30: #{tpu_custom_call.1} parent=27 // pred_check_branch
          %1023 = sbr.rel (%p1021) target = $region32
        $region31: #{tpu_custom_call.1} parent=27 // pred_region
          %s1024 = smul.u32 4, %s16
          %s1026 = ssub.s32 1024, 1024
          %1027 = vsyncadd %s1017, %s1026
          %s1028 = smul.addr %s1024, 2
          %s1029 = smul.addr %s1028, 128
          %s1030 = scalar_lea.hbm %s2, %s1029
          %s1031 = sshll.u32 %s1020, 4
          %s1032 = int_to_ptr.vmem [resolvable:$true] %s1031
          %1037 = dma.vmem_to_hbm [thread:$0]  %s1032, 1024, %s1030, %s1017, 256, 256, 16
        $region32: #{tpu_custom_call.1} parent=27 // pred_fallthru
          _
      $region28: #{tpu_custom_call.1} parent=5 // pred_fallthru
        _
      %p1038 = scmp.le.s32.totalorder 2, %s11
      // Predicated region
      $region33: #{tpu_custom_call.1} parent=5 // pred_check
        %p1039 = pneg %p1038
      $region34: #{tpu_custom_call.1} parent=5 // pred_check_branch
        %1041 = sbr.rel (%p1039) target = $region36
      $region35: #{tpu_custom_call.1} parent=5 // pred_region
        %s1042 = ssub.s32 %s11, 2
        // Predicated region
        $region37: #{tpu_custom_call.1} parent=35 // pred_check
          %p1043 = pneg %p87
        $region38: #{tpu_custom_call.1} parent=35 // pred_check_branch
          %1045 = sbr.rel (%p1043) target = $region40
        $region39: #{tpu_custom_call.1} parent=35 // pred_region
          %s1046 = sand.u32 %s72, 1
          %s1047 = scalar_lea.sflag [#allocation3], %s1046
          %s1048 = sand.u32 %s72, 1
          %s1049 = smul.addr %s1048, 64
          %s1050 = scalar_lea.vmem [#allocation2], %s1049
          %1051 = dma.done %s1047, 1024
        $region40: #{tpu_custom_call.1} parent=35 // pred_fallthru
          _
      $region36: #{tpu_custom_call.1} parent=5 // pred_fallthru
        _
    $region6: #{tpu_custom_call.1} parent=1 // loop_footer
      %s15 = sadd.s32 1, %s11
    $region7: #{tpu_custom_call.1} parent=1 // loop_footer_branch
      %10 = sbr.rel target = $region3
    $region8: #{tpu_custom_call.1} parent=1 // loop_exit
      _
    %1052 = vsyncpa [#allocation3], 1
    %s1053 = scalar_lea.sflag [#allocation3], 1
    %1054 = vsyncpa %s1053, 1

</llo_original>
